<compile_context>
chip_gen: v7x
topology: tpu7x:2x2x1
jax: 0.10.0
libtpu: 0.0.40
codegen_flags: <defaults>
</compile_context>

<pallas_src>
import functools

import jax
import jax.numpy as jnp
from jax.experimental import pallas as pl
from jax.experimental.pallas import tpu as pltpu


def _round_up(x, m):
    return ((x + m - 1) // m) * m


def _critic_kernel(x_ref, w1_ref, b1_ref, w2_ref, b2_ref, w3_ref, b3_ref,
                   out_ref, *, compute_dtype):
    # Layer 1: tanh(x @ W1 + b1)   (MXU matmul, f32 accumulate)
    x = x_ref[...].astype(compute_dtype)
    h = jnp.dot(x, w1_ref[...].astype(compute_dtype),
                preferred_element_type=jnp.float32) + b1_ref[...]
    h = jnp.tanh(h)

    # Layer 2: tanh(h @ W2 + b2)
    h = jnp.dot(h.astype(compute_dtype), w2_ref[...].astype(compute_dtype),
                preferred_element_type=jnp.float32) + b2_ref[...]
    h = jnp.tanh(h)

    # Head (out_features == 1): a 1-column matmul would use 1/128-1/256 of the
    # MXU output width, so do it on the VPU (multiply) + XLU (lane reduce).
    # w3 is passed as a (1, h2) row so it broadcasts over the batch tile.
    v = jnp.sum(h * w3_ref[...], axis=-1, keepdims=True) + b3_ref[...]  # (TM, 1)

    # One small XLU transpose per tile -> lane-dense (1, TM) row store.
    out_ref[...] = v.T.astype(out_ref.dtype)


def mlp_critic_forward(obs, params, *, block_m=512, compute_dtype=jnp.float32):
    """obs: [B, obs_dim] float32.  Returns value estimates of shape [B].

    compute_dtype: dtype fed to the MXU matmul operands (jnp.bfloat16 is a
    free ~2x operand-bandwidth win on v6e/v7x); accumulation / bias / tanh
    stay in float32.
    """
    w1, b1, w2, b2, w3, b3 = params
    B, obs_dim = obs.shape
    h1 = w1.shape[1]
    h2 = w2.shape[1]
    w3_row = w3.reshape(1, h2)   # (h2, 1) -> (1, h2) row for in-kernel broadcast

    # Batch tiling: single full-batch tile (rounded up to 8 sublanes) when the
    # batch is small, otherwise lane/sublane-friendly tiles of size block_m.
    if B <= block_m:
        tm = _round_up(B, 8)
        b_pad = tm
    else:
        tm = _round_up(block_m, 128)   # keeps the (1, TM) output block lane-aligned
        b_pad = _round_up(B, tm)
    grid_m = b_pad // tm

    if b_pad != B:
        obs = jnp.pad(obs, ((0, b_pad - B), (0, 0)))

    # Advisory cost hint for the XLA scheduler.
    flops = 2 * b_pad * (obs_dim * h1 + h1 * h2 + h2)
    transcendentals = b_pad * (h1 + h2)
    bytes_accessed = 4 * (b_pad * obs_dim + b_pad
                          + obs_dim * h1 + h1 + h1 * h2 + h2 + h2 + 1)

    kernel = functools.partial(_critic_kernel, compute_dtype=compute_dtype)

    out = pl.pallas_call(
        kernel,
        out_shape=jax.ShapeDtypeStruct((1, b_pad), jnp.float32),
        grid=(grid_m,),
        in_specs=[
            # obs: streamed tile per grid step.
            pl.BlockSpec((tm, obs_dim), lambda i: (i, 0)),
            # weights / biases: constant block index -> fetched once, resident.
            pl.BlockSpec((obs_dim, h1), lambda i: (0, 0)),
            pl.BlockSpec((1, h1), lambda i: (0, 0)),
            pl.BlockSpec((h1, h2), lambda i: (0, 0)),
            pl.BlockSpec((1, h2), lambda i: (0, 0)),
            pl.BlockSpec((1, h2), lambda i: (0, 0)),
            pl.BlockSpec((1, 1), lambda i: (0, 0)),
        ],
        # Lane-dense output: each grid step writes a (1, TM) row slab.
        out_specs=pl.BlockSpec((1, tm), lambda i: (0, i)),
        compiler_params=pltpu.CompilerParams(
            dimension_semantics=("parallel",)),
        cost_estimate=pl.CostEstimate(
            flops=flops,
            transcendentals=transcendentals,
            bytes_accessed=bytes_accessed),
    )(obs, w1, b1, w2, b2, w3_row, b3)

    # torch.squeeze(..., -1) + drop batch padding.
    return out[0, :B]


def init_params(key, obs_dim, hidden_sizes):
    """Deterministic init mimicking nn.Linear's U(-1/sqrt(fan_in), 1/sqrt(fan_in)).

    Weights stored [in_features, out_features]; biases stored [1, out_features].
    """
    sizes = [obs_dim] + list(hidden_sizes) + [1]
    params = []
    for j in range(len(sizes) - 1):
        fan_in, fan_out = sizes[j], sizes[j + 1]
        key, kw, kb = jax.random.split(key, 3)
        bound = 1.0 / jnp.sqrt(jnp.float32(fan_in))
        w = jax.random.uniform(
            kw, (fan_in, fan_out), jnp.float32, minval=-bound, maxval=bound)
        b = jax.random.uniform(
            kb, (1, fan_out), jnp.float32, minval=-bound, maxval=bound)
        params += [w, b]
    return tuple(params)


def _reference(obs, params):
    w1, b1, w2, b2, w3, b3 = params
    h = jnp.tanh(obs @ w1 + b1)
    h = jnp.tanh(h @ w2 + b2)
    return jnp.squeeze(h @ w3 + b3, axis=-1)


if __name__ == "__main__":
    key = jax.random.PRNGKey(0)
    obs_dim, hidden_sizes = 16, (32, 32)

    k_obs_a, k_obs_b, k_par = jax.random.split(key, 3)
    params = init_params(k_par, obs_dim, hidden_sizes)

    # Case 1: tiny batch (single tile, full-batch block).
    obs_a = jax.random.normal(k_obs_a, (8, obs_dim), jnp.float32)
    v_a = mlp_critic_forward(obs_a, params)
    jax.block_until_ready(v_a)

    # Case 2: larger batch exercising the multi-tile grid + padding path
    # (block_m=128 -> 3 tiles of 128 covering a padded batch of 384).
    obs_b = jax.random.normal(k_obs_b, (300, obs_dim), jnp.float32)
    v_b = mlp_critic_forward(obs_b, params, block_m=128)
    jax.block_until_ready(v_b)

    with jax.default_matmul_precision("highest"):
        v_a_ref = _reference(obs_a, params)
        v_b_ref = _reference(obs_b, params)

    assert v_a.shape == (8,)
    assert v_b.shape == (300,)
    assert jnp.allclose(v_a, v_a_ref, atol=1e-4, rtol=1e-4)
    assert jnp.allclose(v_b, v_b_ref, atol=1e-4, rtol=1e-4)

    print("KERNEL_OK")
</pallas_src>

<mosaic_0001>
module attributes {stable_mosaic.version = 11 : i64} {
  func.func @_critic_kernel(%arg0: i32, %arg1: memref<8x16xf32, #tpu.memory_space<vmem>>, %arg2: memref<16x32xf32, #tpu.memory_space<vmem>>, %arg3: memref<1x32xf32, #tpu.memory_space<vmem>>, %arg4: memref<32x32xf32, #tpu.memory_space<vmem>>, %arg5: memref<1x32xf32, #tpu.memory_space<vmem>>, %arg6: memref<1x32xf32, #tpu.memory_space<vmem>>, %arg7: memref<1x1xf32, #tpu.memory_space<vmem>>, %arg8: memref<1x8xf32, #tpu.memory_space<vmem>>) attributes {dimension_semantics = [#tpu.dimension_semantics<parallel>], iteration_bounds = array<i64: 1>, scalar_prefetch = 0 : i64, scratch_operands = 0 : i64, tpu.core_type = #tpu.core_type<tc>, window_params = [{transform_indices = @transform_0, window_bounds = array<i64: 8, 16>}, {pipeline_mode = #tpu.pipeline_mode<synchronous>, transform_indices = @transform_1, window_bounds = array<i64: 16, 32>}, {pipeline_mode = #tpu.pipeline_mode<synchronous>, transform_indices = @transform_2, window_bounds = array<i64: 1, 32>}, {pipeline_mode = #tpu.pipeline_mode<synchronous>, transform_indices = @transform_3, window_bounds = array<i64: 32, 32>}, {pipeline_mode = #tpu.pipeline_mode<synchronous>, transform_indices = @transform_4, window_bounds = array<i64: 1, 32>}, {pipeline_mode = #tpu.pipeline_mode<synchronous>, transform_indices = @transform_5, window_bounds = array<i64: 1, 32>}, {pipeline_mode = #tpu.pipeline_mode<synchronous>, transform_indices = @transform_6, window_bounds = array<i64: 1, 1>}, {transform_indices = @transform_7, window_bounds = array<i64: 1, 8>}]} {
    %c0 = arith.constant 0 : index
    %c0_0 = arith.constant 0 : index
    %0 = vector.load %arg1[%c0, %c0_0] : memref<8x16xf32, #tpu.memory_space<vmem>>, vector<8x16xf32>
    %c0_1 = arith.constant 0 : index
    %c0_2 = arith.constant 0 : index
    %1 = vector.load %arg2[%c0_1, %c0_2] : memref<16x32xf32, #tpu.memory_space<vmem>>, vector<16x32xf32>
    %cst = arith.constant dense<0.000000e+00> : vector<8x32xf32>
    %2 = tpu.matmul %0, %1, %cst {dimension_numbers = #tpu.dot_dimension_numbers<[1], [0], [0], [1], [0, 0, 1, 1], [], []>} : vector<8x16xf32>, vector<16x32xf32>, vector<8x32xf32> -> vector<8x32xf32>
    %c0_3 = arith.constant 0 : index
    %c0_4 = arith.constant 0 : index
    %3 = vector.load %arg3[%c0_3, %c0_4] : memref<1x32xf32, #tpu.memory_space<vmem>>, vector<1x32xf32>
    %4 = vector.broadcast %3 : vector<1x32xf32> to vector<8x32xf32>
    %5 = arith.addf %2, %4 : vector<8x32xf32>
    %6 = math.tanh %5 : vector<8x32xf32>
    %c0_5 = arith.constant 0 : index
    %c0_6 = arith.constant 0 : index
    %7 = vector.load %arg4[%c0_5, %c0_6] : memref<32x32xf32, #tpu.memory_space<vmem>>, vector<32x32xf32>
    %cst_7 = arith.constant dense<0.000000e+00> : vector<8x32xf32>
    %8 = tpu.matmul %6, %7, %cst_7 {dimension_numbers = #tpu.dot_dimension_numbers<[1], [0], [0], [1], [0, 0, 1, 1], [], []>} : vector<8x32xf32>, vector<32x32xf32>, vector<8x32xf32> -> vector<8x32xf32>
    %c0_8 = arith.constant 0 : index
    %c0_9 = arith.constant 0 : index
    %9 = vector.load %arg5[%c0_8, %c0_9] : memref<1x32xf32, #tpu.memory_space<vmem>>, vector<1x32xf32>
    %10 = vector.broadcast %9 : vector<1x32xf32> to vector<8x32xf32>
    %11 = arith.addf %8, %10 : vector<8x32xf32>
    %12 = math.tanh %11 : vector<8x32xf32>
    %c0_10 = arith.constant 0 : index
    %c0_11 = arith.constant 0 : index
    %13 = vector.load %arg6[%c0_10, %c0_11] : memref<1x32xf32, #tpu.memory_space<vmem>>, vector<1x32xf32>
    %14 = vector.broadcast %13 : vector<1x32xf32> to vector<8x32xf32>
    %15 = arith.mulf %12, %14 : vector<8x32xf32>
    %cst_12 = arith.constant dense<0.000000e+00> : vector<8xf32>
    %16 = vector.multi_reduction <add>, %15, %cst_12 [1] : vector<8x32xf32> to vector<8xf32>
    %17 = vector.shape_cast %16 : vector<8xf32> to vector<8x1xf32>
    %c0_13 = arith.constant 0 : index
    %c0_14 = arith.constant 0 : index
    %18 = vector.load %arg7[%c0_13, %c0_14] : memref<1x1xf32, #tpu.memory_space<vmem>>, vector<1x1xf32>
    %19 = vector.broadcast %18 : vector<1x1xf32> to vector<8x1xf32>
    %20 = arith.addf %17, %19 : vector<8x1xf32>
    %21 = tpu.transpose %20, [1, 0] : vector<8x1xf32> -> vector<1x8xf32>
    %c0_15 = arith.constant 0 : index
    %c0_16 = arith.constant 0 : index
    %22 = vector.load %arg8[%c0_15, %c0_16] : memref<1x8xf32, #tpu.memory_space<vmem>>, vector<1x8xf32>
    tpu.vector_store %arg8[%c0_15, %c0_16], %21 {strides = array<i32>} : memref<1x8xf32, #tpu.memory_space<vmem>>, vector<1x8xf32>,
    return
  }
  func.func @transform_0(%arg0: i32) -> (i32, i32) {
    %c0_i32 = arith.constant 0 : i32
    %c0_i32_0 = arith.constant 0 : i32
    return %arg0, %c0_i32 : i32, i32
  }
  func.func @transform_1(%arg0: i32) -> (i32, i32) {
    %c0_i32 = arith.constant 0 : i32
    %c0_i32_0 = arith.constant 0 : i32
    %c0_i32_1 = arith.constant 0 : i32
    return %c0_i32, %c0_i32_0 : i32, i32
  }
  func.func @transform_2(%arg0: i32) -> (i32, i32) {
    %c0_i32 = arith.constant 0 : i32
    %c0_i32_0 = arith.constant 0 : i32
    %c0_i32_1 = arith.constant 0 : i32
    return %c0_i32, %c0_i32_0 : i32, i32
  }
  func.func @transform_3(%arg0: i32) -> (i32, i32) {
    %c0_i32 = arith.constant 0 : i32
    %c0_i32_0 = arith.constant 0 : i32
    %c0_i32_1 = arith.constant 0 : i32
    return %c0_i32, %c0_i32_0 : i32, i32
  }
  func.func @transform_4(%arg0: i32) -> (i32, i32) {
    %c0_i32 = arith.constant 0 : i32
    %c0_i32_0 = arith.constant 0 : i32
    %c0_i32_1 = arith.constant 0 : i32
    return %c0_i32, %c0_i32_0 : i32, i32
  }
  func.func @transform_5(%arg0: i32) -> (i32, i32) {
    %c0_i32 = arith.constant 0 : i32
    %c0_i32_0 = arith.constant 0 : i32
    %c0_i32_1 = arith.constant 0 : i32
    return %c0_i32, %c0_i32_0 : i32, i32
  }
  func.func @transform_6(%arg0: i32) -> (i32, i32) {
    %c0_i32 = arith.constant 0 : i32
    %c0_i32_0 = arith.constant 0 : i32
    %c0_i32_1 = arith.constant 0 : i32
    return %c0_i32, %c0_i32_0 : i32, i32
  }
  func.func @transform_7(%arg0: i32) -> (i32, i32) {
    %c0_i32 = arith.constant 0 : i32
    %c0_i32_0 = arith.constant 0 : i32
    return %c0_i32, %arg0 : i32, i32
  }
}

</mosaic_0001>

<llo_original>
// kernel: tpu_custom_call.1
$region0: #{tpu_custom_call.1}
  #allocation0 [shape = 'u32[]', space=smem, size = 0x4, offset = 0x4, fixed_abs, tag = 'smem constant byte address 0x4 - core index']
  #allocation1 [shape = 'u32[144,128]{1,0:T(1,128)}', space=vmem, size = 0x12000, scoped, tag = 'internal scratch']
  #allocation2 [shape = 'f32[1,1]{1,0:T(1,128)S(1)}', space=vmem, size = 0x200, scoped, tag = 'scoped memory for tpu_custom_call.1']
  %s0 = inlined_call_operand.hbm [shape: f32[8,16], index: 0, kind: input, shape index: {}]
  %s1 = inlined_call_operand.hbm [shape: f32[16,32], index: 1, kind: input, shape index: {}]
  %s2 = inlined_call_operand.vmem [shape: f32[1,32], index: 2, kind: input, shape index: {}]
  %s3 = inlined_call_operand.hbm [shape: f32[32,32], index: 3, kind: input, shape index: {}]
  %s4 = inlined_call_operand.vmem [shape: f32[1,32], index: 4, kind: input, shape index: {}]
  %s5 = inlined_call_operand.vmem [shape: f32[1,32], index: 5, kind: input, shape index: {}]
  %s6 = inlined_call_operand.<no memory space> [shape: f32[1,1], index: 6, kind: input, shape index: {}]
  %s7 = inlined_call_operand.hbm [shape: f32[1,8], index: 7, kind: output, shape index: {}]
  %s8 = sld [smem:[#allocation0]]
  $region50: #{tpu_custom_call.1} parent=0
    _
  %s10 = ssub.s32 1, %s8
  %s11 = scalar_select 0, %s10, %s8
  %v12 = vstv %s6
  %13 = vst [vmem:[#allocation2] sm:$0x1] %v12
  $region1: #{tpu_custom_call.1} parent=0
    #allocation3 [shape = 'u8[4096]{0}', space=vmem, size = 0x1000, scoped, tag = 'input window, operand 0, single buffered']
    #allocation4 [shape = 's32[1]{0}', space=sflag, size = 0x4, scoped, tag = 'scoped memory for tpu_custom_call.1']
    #allocation5 [shape = 's32[1]{0}', space=sflag, size = 0x4, scoped, tag = 'scoped memory for tpu_custom_call.1']
    #allocation6 [shape = 'u8[8192]{0}', space=vmem, size = 0x2000, scoped, tag = 'input window, operand 1, single buffered']
    #allocation7 [shape = 's32[1]{0}', space=sflag, size = 0x4, scoped, tag = 'scoped memory for tpu_custom_call.1']
    #allocation8 [shape = 'u8[16384]{0}', space=vmem, size = 0x4000, scoped, tag = 'input window, operand 3, single buffered']
    #allocation9 [shape = 'u8[512]{0}', space=vmem, size = 0x400, scoped, tag = 'output window, operand 0, single buffered']
    %14 = vsyncpa [#allocation4], 0
    %15 = vsyncpa [#allocation7], 0
    %16 = vsyncpa [#allocation5], 0
    // Predicated region
    $region2: #{tpu_custom_call.1} parent=1 // pred_check
      _
    $region3: #{tpu_custom_call.1} parent=1 // pred_check_branch
      %18 = sbr.rel (0) target = $region5
    $region4: #{tpu_custom_call.1} parent=1 // pred_region
      %s20 = ssub.s32 128, 128
      %21 = vsyncadd [#allocation4], %s20
      %s23 = sshll.u32 [#allocation3], 4
      %s24 = int_to_ptr.vmem [resolvable:$true] %s23
      %26 = dma.hbm_to_vmem [thread:$0]  %s0, 128, %s24, [#allocation4]
    $region5: #{tpu_custom_call.1} parent=1 // pred_fallthru
      _
    // Predicated region
    $region6: #{tpu_custom_call.1} parent=1 // pred_check
      _
    $region7: #{tpu_custom_call.1} parent=1 // pred_check_branch
      %28 = sbr.rel (0) target = $region9
    $region8: #{tpu_custom_call.1} parent=1 // pred_region
      %s30 = ssub.s32 256, 256
      %31 = vsyncadd [#allocation7], %s30
      %s32 = sshll.u32 [#allocation6], 4
      %s33 = int_to_ptr.vmem [resolvable:$true] %s32
      %38 = dma.hbm_to_vmem [thread:$0]  %s1, 256, %s33, [#allocation7], 128, 128, 8
    $region9: #{tpu_custom_call.1} parent=1 // pred_fallthru
      _
    // Predicated region
    $region10: #{tpu_custom_call.1} parent=1 // pred_check
      _
    $region11: #{tpu_custom_call.1} parent=1 // pred_check_branch
      %40 = sbr.rel (0) target = $region13
    $region12: #{tpu_custom_call.1} parent=1 // pred_region
      _
    $region13: #{tpu_custom_call.1} parent=1 // pred_fallthru
      _
    // Predicated region
    $region14: #{tpu_custom_call.1} parent=1 // pred_check
      _
    $region15: #{tpu_custom_call.1} parent=1 // pred_check_branch
      %42 = sbr.rel (0) target = $region17
    $region16: #{tpu_custom_call.1} parent=1 // pred_region
      %s44 = ssub.s32 512, 512
      %45 = vsyncadd [#allocation7], %s44
      %s46 = sshll.u32 [#allocation8], 4
      %s47 = int_to_ptr.vmem [resolvable:$true] %s46
      %52 = dma.hbm_to_vmem [thread:$0]  %s3, 512, %s47, [#allocation7], 128, 128, 8
    $region17: #{tpu_custom_call.1} parent=1 // pred_fallthru
      _
    // Predicated region
    $region18: #{tpu_custom_call.1} parent=1 // pred_check
      _
    $region19: #{tpu_custom_call.1} parent=1 // pred_check_branch
      %54 = sbr.rel (0) target = $region21
    $region20: #{tpu_custom_call.1} parent=1 // pred_region
      _
    $region21: #{tpu_custom_call.1} parent=1 // pred_fallthru
      _
    // Predicated region
    $region22: #{tpu_custom_call.1} parent=1 // pred_check
      _
    $region23: #{tpu_custom_call.1} parent=1 // pred_check_branch
      %56 = sbr.rel (0) target = $region25
    $region24: #{tpu_custom_call.1} parent=1 // pred_region
      _
    $region25: #{tpu_custom_call.1} parent=1 // pred_fallthru
      _
    // Predicated region
    $region26: #{tpu_custom_call.1} parent=1 // pred_check
      _
    $region27: #{tpu_custom_call.1} parent=1 // pred_check_branch
      %58 = sbr.rel (0) target = $region29
    $region28: #{tpu_custom_call.1} parent=1 // pred_region
      _
    $region29: #{tpu_custom_call.1} parent=1 // pred_fallthru
      _
    // Predicated region
    $region30: #{tpu_custom_call.1} parent=1 // pred_check
      _
    $region31: #{tpu_custom_call.1} parent=1 // pred_check_branch
      %60 = sbr.rel (0) target = $region33
    $region32: #{tpu_custom_call.1} parent=1 // pred_region
      %61 = dma.done [#allocation4], 128
    $region33: #{tpu_custom_call.1} parent=1 // pred_fallthru
      _
    // Predicated region
    $region34: #{tpu_custom_call.1} parent=1 // pred_check
      _
    $region35: #{tpu_custom_call.1} parent=1 // pred_check_branch
      %63 = sbr.rel (0) target = $region37
    $region36: #{tpu_custom_call.1} parent=1 // pred_region
      %64 = dma.done [#allocation7], 256
    $region37: #{tpu_custom_call.1} parent=1 // pred_fallthru
      _
    // Predicated region
    $region38: #{tpu_custom_call.1} parent=1 // pred_check
      _
    $region39: #{tpu_custom_call.1} parent=1 // pred_check_branch
      %66 = sbr.rel (0) target = $region41
    $region40: #{tpu_custom_call.1} parent=1 // pred_region
      %67 = dma.done [#allocation7], 512
    $region41: #{tpu_custom_call.1} parent=1 // pred_fallthru
      _
    %v68 = vld [vmem:[#allocation3] sm:$0xff]
    %v69 = vld [vmem:[#allocation6] sm:$0xff]
    %v70 = vld [vmem:[#allocation6 + $0x8] sm:$0xff]
    %v71 = vld [vmem:[%s2] sm:$0x1]
    %v73 = vlaneseq
    %v74 = vshrl.u32 %v73, 7
    %v75 = vsub.s32 0, %v74
    %v76 = vrot.slane %v71, %v75
    %vm78 = vcmask 130048
    %v80 = vsel %vm78, %v68, 0
    %82 = vmatprep.subr.mxu0 0.0
    %83 = vmatpush1.msra.mxu0 %v69
    %84 = vmatprep.subr.mxu0 0.0
    %85 = vmatpush1.msra.mxu0 %v70
    %86 = vmatprep.subr.mxu0 0.0
    %87 = vmatpush1.msra.mxu0 0.0
    %88 = vmatprep.subr.mxu0 0.0
    %89 = vmatpush1.msra.mxu0 0.0
    %90 = vmatprep.subr.mxu0 0.0
    %91 = vmatpush1.msra.mxu0 0.0
    %92 = vmatprep.subr.mxu0 0.0
    %93 = vmatpush1.msra.mxu0 0.0
    %94 = vmatprep.subr.mxu0 0.0
    %95 = vmatpush1.msra.mxu0 0.0
    %96 = vmatprep.subr.mxu0 0.0
    %97 = vmatpush1.msra.mxu0 0.0
    %98 = vmatprep.subr.mxu0 0.0
    %99 = vmatpush1.msra.mxu0 0.0
    %100 = vmatprep.subr.mxu0 0.0
    %101 = vmatpush1.msra.mxu0 0.0
    %102 = vmatprep.subr.mxu0 0.0
    %103 = vmatpush1.msra.mxu0 0.0
    %104 = vmatprep.subr.mxu0 0.0
    %105 = vmatpush1.msra.mxu0 0.0
    %106 = vmatprep.subr.mxu0 0.0
    %107 = vmatpush1.msra.mxu0 0.0
    %108 = vmatprep.subr.mxu0 0.0
    %109 = vmatpush1.msra.mxu0 0.0
    %110 = vmatprep.subr.mxu0 0.0
    %111 = vmatpush1.msra.mxu0 0.0
    %112 = vmatprep.subr.mxu0 0.0
    %113 = vmatpush1.msra.mxu0 0.0
    %114 = vmatprep.subr.mxu0 0.0
    %115 = vmatpush1.msra.mxu0 0.0
    %116 = vmatprep.subr.mxu0 0.0
    %117 = vmatpush1.msra.mxu0 0.0
    %118 = vmatprep.subr.mxu0 0.0
    %119 = vmatpush1.msra.mxu0 0.0
    %120 = vmatprep.subr.mxu0 0.0
    %121 = vmatpush1.msra.mxu0 0.0
    %122 = vmatprep.subr.mxu0 0.0
    %123 = vmatpush1.msra.mxu0 0.0
    %124 = vmatprep.subr.mxu0 0.0
    %125 = vmatpush1.msra.mxu0 0.0
    %126 = vmatprep.subr.mxu0 0.0
    %127 = vmatpush1.msra.mxu0 0.0
    %128 = vmatprep.subr.mxu0 0.0
    %129 = vmatpush1.msra.mxu0 0.0
    %130 = vmatprep.subr.mxu0 0.0
    %131 = vmatpush1.msra.mxu0 0.0
    %132 = vmatprep.subr.mxu0 0.0
    %133 = vmatpush1.msra.mxu0 0.0
    %134 = vmatprep.subr.mxu0 0.0
    %135 = vmatpush1.msra.mxu0 0.0
    %136 = vmatprep.subr.mxu0 0.0
    %137 = vmatpush1.msra.mxu0 0.0
    %138 = vmatprep.subr.mxu0 0.0
    %139 = vmatpush1.msra.mxu0 0.0
    %140 = vmatprep.subr.mxu0 0.0
    %141 = vmatpush1.msra.mxu0 0.0
    %142 = vmatprep.subr.mxu0 0.0
    %143 = vmatpush1.msra.mxu0 0.0
    %144 = vmatprep.subr.mxu0 0.0
    %145 = vmatpush1.msra.mxu0 0.0
    %146 = vmatprep.mubr.f32.mxu0 0.0
    %147 = vmatmul.mubr.f32.gmra.mrb[0].mxu0 %v80
    %v148 = vpop.f32.mrb[0].mxu0
    %v149 = vadd.f32 %v76, %v148
    %v150 = vpop.f32.mrb[0].mxu0
    %151 = vdwg.mxu0
    %v152 = vtanh.pop %v149
    %v153 = vld [vmem:[#allocation8] sm:$0xff]
    %v154 = vld [vmem:[#allocation8 + $0x8] sm:$0xff]
    %v155 = vld [vmem:[#allocation8 + $0x10] sm:$0xff]
    %v156 = vld [vmem:[#allocation8 + $0x18] sm:$0xff]
    %v157 = vld [vmem:[%s4] sm:$0x1]
    %v159 = vlaneseq
    %v160 = vshrl.u32 %v159, 7
    %v161 = vsub.s32 0, %v160
    %v162 = vrot.slane %v157, %v161
    %vm164 = vcmask 261120
    %v166 = vsel %vm164, %v152, 0
    %168 = vmatprep.subr.mxu0 0.0
    %169 = vmatpush1.msra.mxu0 %v153
    %170 = vmatprep.subr.mxu0 0.0
    %171 = vmatpush1.msra.mxu0 %v154
    %172 = vmatprep.subr.mxu0 0.0
    %173 = vmatpush1.msra.mxu0 %v155
    %174 = vmatprep.subr.mxu0 0.0
    %175 = vmatpush1.msra.mxu0 %v156
    %176 = vmatprep.subr.mxu0 0.0
    %177 = vmatpush1.msra.mxu0 0.0
    %178 = vmatprep.subr.mxu0 0.0
    %179 = vmatpush1.msra.mxu0 0.0
    %180 = vmatprep.subr.mxu0 0.0
    %181 = vmatpush1.msra.mxu0 0.0
    %182 = vmatprep.subr.mxu0 0.0
    %183 = vmatpush1.msra.mxu0 0.0
    %184 = vmatprep.subr.mxu0 0.0
    %185 = vmatpush1.msra.mxu0 0.0
    %186 = vmatprep.subr.mxu0 0.0
    %187 = vmatpush1.msra.mxu0 0.0
    %188 = vmatprep.subr.mxu0 0.0
    %189 = vmatpush1.msra.mxu0 0.0
    %190 = vmatprep.subr.mxu0 0.0
    %191 = vmatpush1.msra.mxu0 0.0
    %192 = vmatprep.subr.mxu0 0.0
    %193 = vmatpush1.msra.mxu0 0.0
    %194 = vmatprep.subr.mxu0 0.0
    %195 = vmatpush1.msra.mxu0 0.0
    %196 = vmatprep.subr.mxu0 0.0
    %197 = vmatpush1.msra.mxu0 0.0
    %198 = vmatprep.subr.mxu0 0.0
    %199 = vmatpush1.msra.mxu0 0.0
    %200 = vmatprep.subr.mxu0 0.0
    %201 = vmatpush1.msra.mxu0 0.0
    %202 = vmatprep.subr.mxu0 0.0
    %203 = vmatpush1.msra.mxu0 0.0
    %204 = vmatprep.subr.mxu0 0.0
    %205 = vmatpush1.msra.mxu0 0.0
    %206 = vmatprep.subr.mxu0 0.0
    %207 = vmatpush1.msra.mxu0 0.0
    %208 = vmatprep.subr.mxu0 0.0
    %209 = vmatpush1.msra.mxu0 0.0
    %210 = vmatprep.subr.mxu0 0.0
    %211 = vmatpush1.msra.mxu0 0.0
    %212 = vmatprep.subr.mxu0 0.0
    %213 = vmatpush1.msra.mxu0 0.0
    %214 = vmatprep.subr.mxu0 0.0
    %215 = vmatpush1.msra.mxu0 0.0
    %216 = vmatprep.subr.mxu0 0.0
    %217 = vmatpush1.msra.mxu0 0.0
    %218 = vmatprep.subr.mxu0 0.0
    %219 = vmatpush1.msra.mxu0 0.0
    %220 = vmatprep.subr.mxu0 0.0
    %221 = vmatpush1.msra.mxu0 0.0
    %222 = vmatprep.subr.mxu0 0.0
    %223 = vmatpush1.msra.mxu0 0.0
    %224 = vmatprep.subr.mxu0 0.0
    %225 = vmatpush1.msra.mxu0 0.0
    %226 = vmatprep.subr.mxu0 0.0
    %227 = vmatpush1.msra.mxu0 0.0
    %228 = vmatprep.subr.mxu0 0.0
    %229 = vmatpush1.msra.mxu0 0.0
    %230 = vmatprep.subr.mxu0 0.0
    %231 = vmatpush1.msra.mxu0 0.0
    %232 = vmatprep.mubr.f32.mxu0 0.0
    %233 = vmatmul.mubr.f32.gmra.mrb[0].mxu0 %v166
    %v234 = vpop.f32.mrb[0].mxu0
    %v235 = vadd.f32 %v162, %v234
    %v236 = vpop.f32.mrb[0].mxu0
    %237 = vdwg.mxu0
    %v238 = vtanh.pop %v235
    %v239 = vld [vmem:[%s5] sm:$0x1]
    %v241 = vlaneseq
    %v242 = vshrl.u32 %v241, 7
    %v243 = vsub.s32 0, %v242
    %v244 = vrot.slane %v239, %v243
    %v246 = vmul.f32 %v238, %v244
    %v247 = vsel %vm164, %v246, 0.0
    %248 = vadd.xlane.f32.xlu0 %v247
    %v249 = vpop.xlane.xlu0 %248
    %v250 = vld [vmem:[#allocation2] sm:$0x1]
    %v252 = vlaneseq
    %v253 = vshrl.u32 %v252, 7
    %v254 = vsub.s32 0, %v253
    %v255 = vrot.slane %v250, %v254
    %v257 = vadd.f32 %v249, %v255
    %258 = vxpose.xlu0.b32.start [1/16] %v257, 128
    %259 = vxpose.xlu0.b32.cont [2/16] 0.0, 128
    %260 = vxpose.xlu0.b32.cont [3/16] 0.0, 128
    %261 = vxpose.xlu0.b32.cont [4/16] 0.0, 128
    %262 = vxpose.xlu0.b32.cont [5/16] 0.0, 128
    %263 = vxpose.xlu0.b32.cont [6/16] 0.0, 128
    %264 = vxpose.xlu0.b32.cont [7/16] 0.0, 128
    %265 = vxpose.xlu0.b32.cont [8/16] 0.0, 128
    %266 = vxpose.xlu0.b32.cont [9/16] 0.0, 128
    %267 = vxpose.xlu0.b32.cont [10/16] 0.0, 128
    %268 = vxpose.xlu0.b32.cont [11/16] 0.0, 128
    %269 = vxpose.xlu0.b32.cont [12/16] 0.0, 128
    %270 = vxpose.xlu0.b32.cont [13/16] 0.0, 128
    %271 = vxpose.xlu0.b32.cont [14/16] 0.0, 128
    %272 = vxpose.xlu0.b32.cont [15/16] 0.0, 128
    %273 = vxpose.xlu0.b32.end [16/16] 0.0, 128
    %v274 = vpop.trf.xlu0
    %v275 = vpop.trf.xlu0
    %v276 = vpop.trf.xlu0
    %v277 = vpop.trf.xlu0
    %v278 = vpop.trf.xlu0
    %v279 = vpop.trf.xlu0
    %v280 = vpop.trf.xlu0
    %v281 = vpop.trf.xlu0
    %v282 = vpop.trf.xlu0
    %v283 = vpop.trf.xlu0
    %v284 = vpop.trf.xlu0
    %v285 = vpop.trf.xlu0
    %v286 = vpop.trf.xlu0
    %v287 = vpop.trf.xlu0
    %v288 = vpop.trf.xlu0
    %v289 = vpop.trf.xlu0
    %vm290 = vcmask 57344
    %291 = vst.msk [vmem:[#allocation9] sm:$0x1] %vm290, %v274
    // Predicated region
    $region42: #{tpu_custom_call.1} parent=1 // pred_check
      _
    $region43: #{tpu_custom_call.1} parent=1 // pred_check_branch
      %293 = sbr.rel (0) target = $region45
    $region44: #{tpu_custom_call.1} parent=1 // pred_region
      %s295 = ssub.s32 16, 16
      %296 = vsyncadd [#allocation5], %s295
      %s298 = sshll.u32 [#allocation9], 4
      %s299 = int_to_ptr.vmem [resolvable:$true] %s298
      %301 = dma.vmem_to_hbm [thread:$0]  %s299, 16, %s7, [#allocation5]
    $region45: #{tpu_custom_call.1} parent=1 // pred_fallthru
      _
    // Predicated region
    $region46: #{tpu_custom_call.1} parent=1 // pred_check
      _
    $region47: #{tpu_custom_call.1} parent=1 // pred_check_branch
      %303 = sbr.rel (0) target = $region49
    $region48: #{tpu_custom_call.1} parent=1 // pred_region
      %304 = dma.done [#allocation5], 16
    $region49: #{tpu_custom_call.1} parent=1 // pred_fallthru
      _
    %305 = vsyncpa [#allocation4], 1
    %306 = vsyncpa [#allocation7], 1
    %307 = vsyncpa [#allocation5], 1

</llo_original>
